<compile_context>
chip_gen: v6e
topology: v6e:2x2x1
jax: 0.10.0
libtpu: 0.0.40
codegen_flags: <defaults>
</compile_context>

<pallas_src>
import jax
import jax.numpy as jnp
import numpy as np
from jax import lax
from jax.experimental import pallas as pl
from jax.experimental.pallas import tpu as pltpu


# ---------------------------------------------------------------------------
# tiling helpers
# ---------------------------------------------------------------------------
def _round_up(n, m):
    return ((n + m - 1) // m) * m


def _row_tile(n, unit, cap, min_blocks=1):
    """Sublane (row) tile: multiple of `unit`, <= cap; optionally split into
    >= min_blocks blocks (so both v7x TensorCores get rows)."""
    t = min(cap, _round_up(n, unit))
    if min_blocks > 1 and n >= min_blocks * unit:
        t = min(t, _round_up(-(-n // min_blocks), unit))
    return max(unit, t)


def _lane_tile(n, cap):
    """Lane tile: multiple of 128, <= cap (cdiv grid handles the remainder)."""
    return max(128, min(cap, _round_up(n, 128)))


# ---------------------------------------------------------------------------
# fused single-launch fast path (per-batch grid, everything VMEM-resident)
# ---------------------------------------------------------------------------
def _make_fused_kernel(inv_hw):
    def fused_kernel(x1_ref, x2_ref, wfc1t_ref, wfc2t_ref, wt1t_ref, wt2t_ref,
                     o1_ref, o2_ref):
        # x refs are (C, HW): the batch dim is squeezed by the BlockSpec.
        x1 = x1_ref[...]
        x2 = x2_ref[...]

        # GAP (f32 accumulation regardless of streaming dtype).
        s1 = jnp.sum(x1.astype(jnp.float32), axis=-1, keepdims=True) * inv_hw
        s2 = jnp.sum(x2.astype(jnp.float32), axis=-1, keepdims=True) * inv_hw

        # fc -> ReLU -> trans1/trans2, all with transposed weights so the
        # pooled vector stays (.., 1) on sublanes: g^T = Wfc^T @ gap^T.
        g = (jnp.dot(wfc1t_ref[...], s1, preferred_element_type=jnp.float32) +
             jnp.dot(wfc2t_ref[...], s2, preferred_element_type=jnp.float32))
        g = jnp.maximum(g, 0.0)                                     # (d, 1)
        a1 = jnp.dot(wt1t_ref[...], g, preferred_element_type=jnp.float32)
        a2 = jnp.dot(wt2t_ref[...], g, preferred_element_type=jnp.float32)

        # softmax over the 2-element stack (torch dim=1).
        m = jnp.maximum(a1, a2)
        e1 = jnp.exp(a1 - m)
        e2 = jnp.exp(a2 - m)
        inv = pl.reciprocal(e1 + e2, approx=False)
        dt = x1.dtype
        ws = (e1 * inv).astype(dt)      # (C, 1) sublane-oriented weights
        wo = (e2 * inv).astype(dt)

        # blend + final ReLU (pure VPU broadcast over lanes).
        o1_ref[...] = jnp.maximum(ws * x1 + wo * x2, 0).astype(o1_ref.dtype)
        o2_ref[...] = jnp.maximum(ws * x2 + wo * x1, 0).astype(o2_ref.dtype)

    return fused_kernel


# ---------------------------------------------------------------------------
# streaming pass 1: global average pool sums over (B*C, HW) tiles
# ---------------------------------------------------------------------------
def _make_gap_kernel(hw, lane_tile, needs_mask):
    def gap_kernel(x1_ref, x2_ref, s1_ref, s2_ref):
        # Output blocks are resident across the (last, 'arbitrary') axis.
        @pl.when(pl.program_id(1) == 0)
        def _():
            s1_ref[...] = jnp.zeros_like(s1_ref)
            s2_ref[...] = jnp.zeros_like(s2_ref)

        x1 = x1_ref[...].astype(jnp.float32)
        x2 = x2_ref[...].astype(jnp.float32)
        if needs_mask:
            # Edge block along HW: out-of-bounds input lanes are unspecified,
            # so zero them before accumulating.
            col = (lax.broadcasted_iota(jnp.int32, x1.shape, 1)
                   + pl.program_id(1) * lane_tile)
            keep = col < hw
            x1 = jnp.where(keep, x1, 0.0)
            x2 = jnp.where(keep, x2, 0.0)

        s1_ref[...] += jnp.sum(x1, axis=-1, keepdims=True)
        s2_ref[...] += jnp.sum(x2, axis=-1, keepdims=True)

    return gap_kernel


# ---------------------------------------------------------------------------
# streaming pass 3: weighted blend + final ReLU
# ---------------------------------------------------------------------------
def blend_kernel(ws_ref, wo_ref, x1_ref, x2_ref, o1_ref, o2_ref):
    dt = x1_ref.dtype
    # (TR, 1) weights live on sublanes and broadcast over lanes: no relayout.
    ws = ws_ref[...].astype(dt)
    wo = wo_ref[...].astype(dt)
    x1 = x1_ref[...]
    x2 = x2_ref[...]
    o1_ref[...] = jnp.maximum(ws * x1 + wo * x2, 0).astype(o1_ref.dtype)
    o2_ref[...] = jnp.maximum(ws * x2 + wo * x1, 0).astype(o2_ref.dtype)


# ---------------------------------------------------------------------------
# wrapper
# ---------------------------------------------------------------------------
def afa_layer_cam(x1, x2, w_fc, w_t1, w_t2, *, force_streaming=False):
    """x1, x2: (B, C, H, W) NCHW.  Returns (out1, out2) with the same shape."""
    B, C, H, W = x1.shape
    HW = H * W
    BC = B * C
    twoC, d = w_fc.shape
    assert twoC == 2 * C and w_t1.shape == (d, C) and w_t2.shape == (d, C)

    itemsize = jnp.dtype(x1.dtype).itemsize
    inv_hw = 1.0 / float(HW)

    # ---- fused single-launch fast path --------------------------------------
    # Per grid step: 2 inputs + 2 outputs of (C, HW) (double-buffered) plus the
    # f32 FC weight copies.  Gate well below the scoped VMEM limit.
    per_batch_bytes = C * HW * itemsize
    weight_bytes = 4 * C * d * 4
    fused_live = 2 * (4 * per_batch_bytes + weight_bytes)
    use_fused = (not force_streaming) and fused_live <= 24 * 1024 * 1024

    if use_fused:
        x1f = x1.reshape(B, C, HW)
        x2f = x2.reshape(B, C, HW)
        # Split + transpose the tiny weights once so in-kernel matmuls keep the
        # pooled vector in (C, 1) sublane orientation.
        wfc1t = jnp.asarray(w_fc[:C].T, dtype=jnp.float32)   # (d, C)
        wfc2t = jnp.asarray(w_fc[C:].T, dtype=jnp.float32)   # (d, C)
        wt1t = jnp.asarray(w_t1.T, dtype=jnp.float32)        # (C, d)
        wt2t = jnp.asarray(w_t2.T, dtype=jnp.float32)        # (C, d)

        o1, o2 = pl.pallas_call(
            _make_fused_kernel(inv_hw),
            grid=(B,),
            in_specs=[
                pl.BlockSpec((None, C, HW), lambda b: (b, 0, 0)),
                pl.BlockSpec((None, C, HW), lambda b: (b, 0, 0)),
                pl.BlockSpec((d, C), lambda b: (0, 0)),
                pl.BlockSpec((d, C), lambda b: (0, 0)),
                pl.BlockSpec((C, d), lambda b: (0, 0)),
                pl.BlockSpec((C, d), lambda b: (0, 0)),
            ],
            out_specs=[
                pl.BlockSpec((None, C, HW), lambda b: (b, 0, 0)),
                pl.BlockSpec((None, C, HW), lambda b: (b, 0, 0)),
            ],
            out_shape=[jax.ShapeDtypeStruct((B, C, HW), x1.dtype),
                       jax.ShapeDtypeStruct((B, C, HW), x2.dtype)],
            compiler_params=pltpu.CompilerParams(
                dimension_semantics=("parallel",),
                vmem_limit_bytes=32 * 1024 * 1024),
            cost_estimate=pl.CostEstimate(
                flops=10 * BC * HW + 8 * B * C * d,
                transcendentals=2 * BC,
                bytes_accessed=4 * BC * HW * itemsize + 4 * weight_bytes),
        )(x1f, x2f, wfc1t, wfc2t, wt1t, wt2t)
        return o1.reshape(B, C, H, W), o2.reshape(B, C, H, W)

    # ---- streaming path (large feature maps) --------------------------------
    x1f = x1.reshape(BC, HW)
    x2f = x2.reshape(BC, HW)
    sub_unit = max(8, 32 // itemsize)          # 8 f32 / 16 bf16 / 32 int8

    # pass 1: GAP sums. Only 2 big streams -> larger lane tiles; force >=2 row
    # blocks so both v7x TensorCores participate in the reduction pass.
    TRg = _row_tile(BC, sub_unit, cap=512, min_blocks=2)
    TCg = _lane_tile(HW, cap=4096)
    grid_g = (pl.cdiv(BC, TRg), pl.cdiv(HW, TCg))

    sum1, sum2 = pl.pallas_call(
        _make_gap_kernel(HW, TCg, HW % TCg != 0),
        grid=grid_g,
        in_specs=[pl.BlockSpec((TRg, TCg), lambda r, c: (r, c)),
                  pl.BlockSpec((TRg, TCg), lambda r, c: (r, c))],
        out_specs=[pl.BlockSpec((TRg, 1), lambda r, c: (r, 0)),
                   pl.BlockSpec((TRg, 1), lambda r, c: (r, 0))],
        out_shape=[jax.ShapeDtypeStruct((BC, 1), jnp.float32),
                   jax.ShapeDtypeStruct((BC, 1), jnp.float32)],
        compiler_params=pltpu.CompilerParams(
            dimension_semantics=("parallel", "arbitrary"),
            vmem_limit_bytes=48 * 1024 * 1024),
        cost_estimate=pl.CostEstimate(
            flops=2 * BC * HW, transcendentals=0,
            bytes_accessed=2 * BC * HW * itemsize + 2 * BC * 4),
    )(x1f, x2f)

    # pass 2: tiny FC / ReLU / trans / softmax in plain jnp (no extra launch).
    gap1 = sum1.reshape(B, C) * inv_hw
    gap2 = sum2.reshape(B, C) * inv_hw
    gcat = jnp.concatenate([gap1, gap2], axis=1).astype(jnp.float32)  # (B, 2C)
    g = jax.nn.relu(gcat @ w_fc.astype(jnp.float32))                  # (B, d)
    a1 = g @ w_t1.astype(jnp.float32)                                 # (B, C)
    a2 = g @ w_t2.astype(jnp.float32)
    m = jnp.maximum(a1, a2)
    e1 = jnp.exp(a1 - m)
    e2 = jnp.exp(a2 - m)
    denom = e1 + e2
    ws = (e1 / denom).reshape(BC, 1)    # per-(b, c) weight, sublane orientation
    wo = (e2 / denom).reshape(BC, 1)

    # pass 3: streaming blend + ReLU. Big lane-dense tiles; both axes parallel.
    TRb = _row_tile(BC, sub_unit, cap=512)
    TCb = _lane_tile(HW, cap=2048)
    grid_b = (pl.cdiv(BC, TRb), pl.cdiv(HW, TCb))

    o1, o2 = pl.pallas_call(
        blend_kernel,
        grid=grid_b,
        in_specs=[pl.BlockSpec((TRb, 1), lambda r, c: (r, 0)),
                  pl.BlockSpec((TRb, 1), lambda r, c: (r, 0)),
                  pl.BlockSpec((TRb, TCb), lambda r, c: (r, c)),
                  pl.BlockSpec((TRb, TCb), lambda r, c: (r, c))],
        out_specs=[pl.BlockSpec((TRb, TCb), lambda r, c: (r, c)),
                   pl.BlockSpec((TRb, TCb), lambda r, c: (r, c))],
        out_shape=[jax.ShapeDtypeStruct((BC, HW), x1.dtype),
                   jax.ShapeDtypeStruct((BC, HW), x2.dtype)],
        compiler_params=pltpu.CompilerParams(
            dimension_semantics=("parallel", "parallel"),
            vmem_limit_bytes=48 * 1024 * 1024),
        cost_estimate=pl.CostEstimate(
            flops=8 * BC * HW, transcendentals=0,
            bytes_accessed=4 * BC * HW * itemsize + 2 * BC * 4),
    )(ws, wo, x1f, x2f)

    return o1.reshape(B, C, H, W), o2.reshape(B, C, H, W)


def reference(x1, x2, w_fc, w_t1, w_t2):
    # pure-JAX reference mirroring the PyTorch forward
    gap1 = jnp.mean(x1, axis=(2, 3))                # (B, C)
    gap2 = jnp.mean(x2, axis=(2, 3))
    cat = jnp.concatenate([gap1, gap2], axis=1)     # (B, 2C)
    g = jax.nn.relu(cat @ w_fc)                     # (B, d)
    g1 = g @ w_t1                                   # (B, C)
    g2 = g @ w_t2
    w = jax.nn.softmax(jnp.stack([g1, g2], axis=1), axis=1)  # (B, 2, C)
    w_self = w[:, 0][:, :, None, None]
    w_other = w[:, 1][:, :, None, None]
    out1 = jax.nn.relu(w_self * x1 + w_other * x2)
    out2 = jax.nn.relu(w_self * x2 + w_other * x1)
    return out1, out2


if __name__ == "__main__":
    afa_jit = jax.jit(afa_layer_cam, static_argnames=("force_streaming",))

    def run_case(B, channels_param, H, W, force_streaming, key):
        # Module config: CAM(channels=channels_param)
        #   cat_channels = channels_param * 8, each input has C = cat_channels/2
        #   d = max(cat_channels / 16, 32); trans1/trans2: d -> C
        cat_channels = channels_param * 8
        C = cat_channels // 2
        d = max(cat_channels // 16, 32)
        k1, k2, k3, k4, k5 = jax.random.split(key, 5)
        x1 = jax.random.normal(k1, (B, C, H, W), dtype=jnp.float32)
        x2 = jax.random.normal(k2, (B, C, H, W), dtype=jnp.float32)
        w_fc = jax.random.normal(k3, (cat_channels, d), dtype=jnp.float32) * 0.1
        w_t1 = jax.random.normal(k4, (d, C), dtype=jnp.float32) * 0.1
        w_t2 = jax.random.normal(k5, (d, C), dtype=jnp.float32) * 0.1

        out1, out2 = afa_jit(x1, x2, w_fc, w_t1, w_t2,
                             force_streaming=force_streaming)
        jax.block_until_ready((out1, out2))

        ref1, ref2 = reference(x1, x2, w_fc, w_t1, w_t2)
        np.testing.assert_allclose(np.asarray(out1), np.asarray(ref1),
                                   atol=1e-4, rtol=1e-4)
        np.testing.assert_allclose(np.asarray(out2), np.asarray(ref2),
                                   atol=1e-4, rtol=1e-4)

    key = jax.random.PRNGKey(0)
    ka, kb, kc = jax.random.split(key, 3)
    # 1) fused single-launch path (small, VMEM-resident shapes)
    run_case(B=2, channels_param=4, H=16, W=16, force_streaming=False, key=ka)
    # 2) streaming path, tile-divisible shapes
    run_case(B=2, channels_param=4, H=16, W=16, force_streaming=True, key=kb)
    # 3) streaming path, awkward spatial size (HW=196): masked GAP + edge blocks
    run_case(B=2, channels_param=3, H=14, W=14, force_streaming=True, key=kc)

    print("KERNEL_OK")
</pallas_src>

<mosaic_0001>
module attributes {stable_mosaic.version = 11 : i64} {
  func.func @fused_kernel(%arg0: i32, %arg1: memref<1x16x256xf32, #tpu.memory_space<vmem>>, %arg2: memref<1x16x256xf32, #tpu.memory_space<vmem>>, %arg3: memref<32x16xf32, #tpu.memory_space<vmem>>, %arg4: memref<32x16xf32, #tpu.memory_space<vmem>>, %arg5: memref<16x32xf32, #tpu.memory_space<vmem>>, %arg6: memref<16x32xf32, #tpu.memory_space<vmem>>, %arg7: memref<1x16x256xf32, #tpu.memory_space<vmem>>, %arg8: memref<1x16x256xf32, #tpu.memory_space<vmem>>) attributes {dimension_semantics = [#tpu.dimension_semantics<parallel>], iteration_bounds = array<i64: 2>, scalar_prefetch = 0 : i64, scratch_operands = 0 : i64, tpu.core_type = #tpu.core_type<tc>, window_params = [{transform_indices = @transform_0, window_bounds = array<i64: 1, 16, 256>}, {transform_indices = @transform_1, window_bounds = array<i64: 1, 16, 256>}, {pipeline_mode = #tpu.pipeline_mode<synchronous>, transform_indices = @transform_2, window_bounds = array<i64: 32, 16>}, {pipeline_mode = #tpu.pipeline_mode<synchronous>, transform_indices = @transform_3, window_bounds = array<i64: 32, 16>}, {pipeline_mode = #tpu.pipeline_mode<synchronous>, transform_indices = @transform_4, window_bounds = array<i64: 16, 32>}, {pipeline_mode = #tpu.pipeline_mode<synchronous>, transform_indices = @transform_5, window_bounds = array<i64: 16, 32>}, {transform_indices = @transform_6, window_bounds = array<i64: 1, 16, 256>}, {transform_indices = @transform_7, window_bounds = array<i64: 1, 16, 256>}]} {
    %c0 = arith.constant 0 : index
    %c0_0 = arith.constant 0 : index
    %c0_1 = arith.constant 0 : index
    %0 = vector.load %arg1[%c0, %c0_0, %c0_1] : memref<1x16x256xf32, #tpu.memory_space<vmem>>, vector<1x16x256xf32>
    %1 = vector.shape_cast %0 : vector<1x16x256xf32> to vector<16x256xf32>
    %c0_2 = arith.constant 0 : index
    %c0_3 = arith.constant 0 : index
    %c0_4 = arith.constant 0 : index
    %2 = vector.load %arg2[%c0_2, %c0_3, %c0_4] : memref<1x16x256xf32, #tpu.memory_space<vmem>>, vector<1x16x256xf32>
    %3 = vector.shape_cast %2 : vector<1x16x256xf32> to vector<16x256xf32>
    %cst = arith.constant dense<0.000000e+00> : vector<16xf32>
    %4 = vector.multi_reduction <add>, %1, %cst [1] : vector<16x256xf32> to vector<16xf32>
    %5 = vector.shape_cast %4 : vector<16xf32> to vector<16x1xf32>
    %cst_5 = arith.constant 3.906250e-03 : f32
    %6 = vector.broadcast %cst_5 : f32 to vector<16x1xf32>
    %7 = arith.mulf %5, %6 : vector<16x1xf32>
    %cst_6 = arith.constant dense<0.000000e+00> : vector<16xf32>
    %8 = vector.multi_reduction <add>, %3, %cst_6 [1] : vector<16x256xf32> to vector<16xf32>
    %9 = vector.shape_cast %8 : vector<16xf32> to vector<16x1xf32>
    %cst_7 = arith.constant 3.906250e-03 : f32
    %10 = vector.broadcast %cst_7 : f32 to vector<16x1xf32>
    %11 = arith.mulf %9, %10 : vector<16x1xf32>
    %c0_8 = arith.constant 0 : index
    %c0_9 = arith.constant 0 : index
    %12 = vector.load %arg3[%c0_8, %c0_9] : memref<32x16xf32, #tpu.memory_space<vmem>>, vector<32x16xf32>
    %cst_10 = arith.constant dense<0.000000e+00> : vector<32x1xf32>
    %13 = tpu.matmul %12, %7, %cst_10 {dimension_numbers = #tpu.dot_dimension_numbers<[1], [0], [0], [1], [0, 0, 1, 1], [], []>} : vector<32x16xf32>, vector<16x1xf32>, vector<32x1xf32> -> vector<32x1xf32>
    %c0_11 = arith.constant 0 : index
    %c0_12 = arith.constant 0 : index
    %14 = vector.load %arg4[%c0_11, %c0_12] : memref<32x16xf32, #tpu.memory_space<vmem>>, vector<32x16xf32>
    %cst_13 = arith.constant dense<0.000000e+00> : vector<32x1xf32>
    %15 = tpu.matmul %14, %11, %cst_13 {dimension_numbers = #tpu.dot_dimension_numbers<[1], [0], [0], [1], [0, 0, 1, 1], [], []>} : vector<32x16xf32>, vector<16x1xf32>, vector<32x1xf32> -> vector<32x1xf32>
    %16 = arith.addf %13, %15 : vector<32x1xf32>
    %cst_14 = arith.constant 0.000000e+00 : f32
    %17 = vector.broadcast %cst_14 : f32 to vector<32x1xf32>
    %18 = arith.maximumf %16, %17 : vector<32x1xf32>
    %c0_15 = arith.constant 0 : index
    %c0_16 = arith.constant 0 : index
    %19 = vector.load %arg5[%c0_15, %c0_16] : memref<16x32xf32, #tpu.memory_space<vmem>>, vector<16x32xf32>
    %cst_17 = arith.constant dense<0.000000e+00> : vector<16x1xf32>
    %20 = tpu.matmul %19, %18, %cst_17 {dimension_numbers = #tpu.dot_dimension_numbers<[1], [0], [0], [1], [0, 0, 1, 1], [], []>} : vector<16x32xf32>, vector<32x1xf32>, vector<16x1xf32> -> vector<16x1xf32>
    %c0_18 = arith.constant 0 : index
    %c0_19 = arith.constant 0 : index
    %21 = vector.load %arg6[%c0_18, %c0_19] : memref<16x32xf32, #tpu.memory_space<vmem>>, vector<16x32xf32>
    %cst_20 = arith.constant dense<0.000000e+00> : vector<16x1xf32>
    %22 = tpu.matmul %21, %18, %cst_20 {dimension_numbers = #tpu.dot_dimension_numbers<[1], [0], [0], [1], [0, 0, 1, 1], [], []>} : vector<16x32xf32>, vector<32x1xf32>, vector<16x1xf32> -> vector<16x1xf32>
    %23 = arith.maximumf %20, %22 : vector<16x1xf32>
    %24 = arith.subf %20, %23 : vector<16x1xf32>
    %25 = math.exp %24 : vector<16x1xf32>
    %26 = arith.subf %22, %23 : vector<16x1xf32>
    %27 = math.exp %26 : vector<16x1xf32>
    %28 = arith.addf %25, %27 : vector<16x1xf32>
    %29 = tpu.reciprocal %28 : vector<16x1xf32> -> vector<16x1xf32>
    %30 = arith.mulf %25, %29 : vector<16x1xf32>
    %31 = arith.mulf %27, %29 : vector<16x1xf32>
    %32 = vector.broadcast %30 : vector<16x1xf32> to vector<16x256xf32>
    %33 = arith.mulf %32, %1 : vector<16x256xf32>
    %34 = vector.broadcast %31 : vector<16x1xf32> to vector<16x256xf32>
    %35 = arith.mulf %34, %3 : vector<16x256xf32>
    %36 = arith.addf %33, %35 : vector<16x256xf32>
    %cst_21 = arith.constant 0.000000e+00 : f32
    %37 = vector.broadcast %cst_21 : f32 to vector<16x256xf32>
    %38 = arith.maximumf %36, %37 : vector<16x256xf32>
    %c0_22 = arith.constant 0 : index
    %c0_23 = arith.constant 0 : index
    %c0_24 = arith.constant 0 : index
    %39 = vector.load %arg7[%c0_22, %c0_23, %c0_24] : memref<1x16x256xf32, #tpu.memory_space<vmem>>, vector<1x16x256xf32>
    %40 = vector.shape_cast %39 : vector<1x16x256xf32> to vector<16x256xf32>
    %41 = vector.shape_cast %38 : vector<16x256xf32> to vector<1x16x256xf32>
    tpu.vector_store %arg7[%c0_22, %c0_23, %c0_24], %41 {strides = array<i32>} : memref<1x16x256xf32, #tpu.memory_space<vmem>>, vector<1x16x256xf32>,
    %42 = vector.broadcast %30 : vector<16x1xf32> to vector<16x256xf32>
    %43 = arith.mulf %42, %3 : vector<16x256xf32>
    %44 = vector.broadcast %31 : vector<16x1xf32> to vector<16x256xf32>
    %45 = arith.mulf %44, %1 : vector<16x256xf32>
    %46 = arith.addf %43, %45 : vector<16x256xf32>
    %cst_25 = arith.constant 0.000000e+00 : f32
    %47 = vector.broadcast %cst_25 : f32 to vector<16x256xf32>
    %48 = arith.maximumf %46, %47 : vector<16x256xf32>
    %c0_26 = arith.constant 0 : index
    %c0_27 = arith.constant 0 : index
    %c0_28 = arith.constant 0 : index
    %49 = vector.load %arg8[%c0_26, %c0_27, %c0_28] : memref<1x16x256xf32, #tpu.memory_space<vmem>>, vector<1x16x256xf32>
    %50 = vector.shape_cast %49 : vector<1x16x256xf32> to vector<16x256xf32>
    %51 = vector.shape_cast %48 : vector<16x256xf32> to vector<1x16x256xf32>
    tpu.vector_store %arg8[%c0_26, %c0_27, %c0_28], %51 {strides = array<i32>} : memref<1x16x256xf32, #tpu.memory_space<vmem>>, vector<1x16x256xf32>,
    return
  }
  func.func @transform_0(%arg0: i32) -> (i32, i32, i32) {
    %c0_i32 = arith.constant 0 : i32
    %c0_i32_0 = arith.constant 0 : i32
    %c0_i32_1 = arith.constant 0 : i32
    return %arg0, %c0_i32, %c0_i32_0 : i32, i32, i32
  }
  func.func @transform_1(%arg0: i32) -> (i32, i32, i32) {
    %c0_i32 = arith.constant 0 : i32
    %c0_i32_0 = arith.constant 0 : i32
    %c0_i32_1 = arith.constant 0 : i32
    return %arg0, %c0_i32, %c0_i32_0 : i32, i32, i32
  }
  func.func @transform_2(%arg0: i32) -> (i32, i32) {
    %c0_i32 = arith.constant 0 : i32
    %c0_i32_0 = arith.constant 0 : i32
    %c0_i32_1 = arith.constant 0 : i32
    return %c0_i32, %c0_i32_0 : i32, i32
  }
  func.func @transform_3(%arg0: i32) -> (i32, i32) {
    %c0_i32 = arith.constant 0 : i32
    %c0_i32_0 = arith.constant 0 : i32
    %c0_i32_1 = arith.constant 0 : i32
    return %c0_i32, %c0_i32_0 : i32, i32
  }
  func.func @transform_4(%arg0: i32) -> (i32, i32) {
    %c0_i32 = arith.constant 0 : i32
    %c0_i32_0 = arith.constant 0 : i32
    %c0_i32_1 = arith.constant 0 : i32
    return %c0_i32, %c0_i32_0 : i32, i32
  }
  func.func @transform_5(%arg0: i32) -> (i32, i32) {
    %c0_i32 = arith.constant 0 : i32
    %c0_i32_0 = arith.constant 0 : i32
    %c0_i32_1 = arith.constant 0 : i32
    return %c0_i32, %c0_i32_0 : i32, i32
  }
  func.func @transform_6(%arg0: i32) -> (i32, i32, i32) {
    %c0_i32 = arith.constant 0 : i32
    %c0_i32_0 = arith.constant 0 : i32
    %c0_i32_1 = arith.constant 0 : i32
    return %arg0, %c0_i32, %c0_i32_0 : i32, i32, i32
  }
  func.func @transform_7(%arg0: i32) -> (i32, i32, i32) {
    %c0_i32 = arith.constant 0 : i32
    %c0_i32_0 = arith.constant 0 : i32
    %c0_i32_1 = arith.constant 0 : i32
    return %arg0, %c0_i32, %c0_i32_0 : i32, i32, i32
  }
}

</mosaic_0001>

<llo_original>
// kernel: afa_layer_cam.1
$region0: #{afa_layer_cam.1}
  #allocation0 [shape = 'u32[]', space=smem, size = 0x4, offset = 0x4, fixed_abs, tag = 'smem constant byte address 0x4 - core index']
  #allocation1 [shape = 'u32[144,128]{1,0:T(1,128)}', space=vmem, size = 0x12000, scoped, tag = 'internal scratch']
  %s0 = inlined_call_operand.vmem [shape: f32[2,16,256], index: 0, kind: input, shape index: {}]
  %s1 = inlined_call_operand.vmem [shape: f32[2,16,256], index: 1, kind: input, shape index: {}]
  %s2 = inlined_call_operand.vmem [shape: f32[32,16], index: 2, kind: input, shape index: {}]
  %s3 = inlined_call_operand.vmem [shape: f32[32,16], index: 3, kind: input, shape index: {}]
  %s4 = inlined_call_operand.vmem [shape: f32[16,32], index: 4, kind: input, shape index: {}]
  %s5 = inlined_call_operand.vmem [shape: f32[16,32], index: 5, kind: input, shape index: {}]
  %s6 = inlined_call_operand.vmem [shape: f32[2,16,256], index: 6, kind: output, shape index: {0}]
  %s7 = inlined_call_operand.vmem [shape: f32[2,16,256], index: 7, kind: output, shape index: {1}]
  %8 = xla_tuple %s6, %s7
  %s9 = sld [smem:[#allocation0]]
  $region65: #{afa_layer_cam.1} parent=0
    _
  %s11 = ssub.s32 1, %s9
  %s12 = scalar_select 0, %s11, %s9
  loop: start=0, step=1, limit=4
  $region2: #{afa_layer_cam.1} parent=0 // loop_pre_header
    _
  $region3: #{afa_layer_cam.1} parent=0 // loop_header
    %s14 = sphi 0, %s18
    %p15 = scmp.ge.s32.totalorder %s14, 4
    %s24 = sphi 0, %s26
    %s27 = sphi 0, %s24
    %s28 = sphi 0, %s27
    %s44 = sphi 0, %s28
    %s50 = sphi 0, %s52
    %s53 = sphi 0, %s50
    %s54 = sphi 0, %s53
    %s70 = sphi 0, %s54
    %s74 = sphi 0, %s74
    %s76 = sphi 0, %s74
    %s77 = sphi 0, %s76
    %s91 = sphi 0, %s77
    %s95 = sphi 0, %s95
    %s97 = sphi 0, %s95
    %s98 = sphi 0, %s97
    %s112 = sphi 0, %s98
    %s116 = sphi 0, %s116
    %s118 = sphi 0, %s116
    %s119 = sphi 0, %s118
    %s133 = sphi 0, %s119
    %s137 = sphi 0, %s137
    %s139 = sphi 0, %s137
    %s140 = sphi 0, %s139
    %s154 = sphi 0, %s140
    %s160 = sphi 0, %s162
    %s163 = sphi 0, %s160
    %s164 = sphi 0, %s163
    %s180 = sphi 0, %s164
    %s186 = sphi 0, %s188
    %s189 = sphi 0, %s186
    %s190 = sphi 0, %s189
    %s206 = sphi 0, %s190
  $region4: #{afa_layer_cam.1} parent=0 // loop_header_branch
    %17 = sbr.rel (%p15) target = $region8
  $region5: #{afa_layer_cam.1} parent=0 // loop_body
    %s19 = ssub.s32 %s14, 1
    %s20 = ssub.s32 %s14, 2
    %s21 = sadd.s32 %s14, 1
    %s22 = ssub.s32 %s14, %s21
    %p23 = scmp.eq.s32.totalorder %s22, 0
    %s25 = sadd.s32 %s24, 1
    %s26 = scalar_select %p23, %s24, %s25
    %p29 = pneg %p23
    %p30 = scmp.eq.s32.totalorder %s14, 1
    %p31 = por %p29, %p30
    %p32 = scmp.ne.s32.totalorder %s24, %s27
    %p33 = scmp.eq.s32.totalorder %s14, 0
    %p34 = por %p32, %p33
    %p35 = scmp.ne.s32.totalorder %s24, %s27
    %p36 = scmp.eq.s32.totalorder %s19, 1
    %p37 = por %p35, %p36
    %p38 = scmp.ne.s32.totalorder %s27, %s28
    %p39 = scmp.eq.s32.totalorder %s19, 0
    %p40 = por %p38, %p39
    %p41 = scmp.ne.s32.totalorder %s27, %s28
    %p42 = scmp.eq.s32.totalorder %s20, 1
    %p43 = por %p41, %p42
    %p45 = scmp.ne.s32.totalorder %s28, %s44
    %p46 = scmp.eq.s32.totalorder %s20, 0
    %p47 = por %p45, %p46
    %s48 = ssub.s32 %s14, %s21
    %p49 = scmp.eq.s32.totalorder %s48, 0
    %s51 = sadd.s32 %s50, 1
    %s52 = scalar_select %p49, %s50, %s51
    %p55 = pneg %p49
    %p56 = scmp.eq.s32.totalorder %s14, 1
    %p57 = por %p55, %p56
    %p58 = scmp.ne.s32.totalorder %s50, %s53
    %p59 = scmp.eq.s32.totalorder %s14, 0
    %p60 = por %p58, %p59
    %p61 = scmp.ne.s32.totalorder %s50, %s53
    %p62 = scmp.eq.s32.totalorder %s19, 1
    %p63 = por %p61, %p62
    %p64 = scmp.ne.s32.totalorder %s53, %s54
    %p65 = scmp.eq.s32.totalorder %s19, 0
    %p66 = por %p64, %p65
    %p67 = scmp.ne.s32.totalorder %s53, %s54
    %p68 = scmp.eq.s32.totalorder %s20, 1
    %p69 = por %p67, %p68
    %p71 = scmp.ne.s32.totalorder %s54, %s70
    %p72 = scmp.eq.s32.totalorder %s20, 0
    %p73 = por %p71, %p72
    %s75 = sadd.s32 %s74, 1
    %p78 = scmp.eq.s32.totalorder %s14, 1
    %p79 = scmp.ne.s32.totalorder %s74, %s76
    %p80 = scmp.eq.s32.totalorder %s14, 0
    %p81 = por %p79, %p80
    %p82 = scmp.ne.s32.totalorder %s74, %s76
    %p83 = scmp.eq.s32.totalorder %s19, 1
    %p84 = por %p82, %p83
    %p85 = scmp.ne.s32.totalorder %s76, %s77
    %p86 = scmp.eq.s32.totalorder %s19, 0
    %p87 = por %p85, %p86
    %p88 = scmp.ne.s32.totalorder %s76, %s77
    %p89 = scmp.eq.s32.totalorder %s20, 1
    %p90 = por %p88, %p89
    %p92 = scmp.ne.s32.totalorder %s77, %s91
    %p93 = scmp.eq.s32.totalorder %s20, 0
    %p94 = por %p92, %p93
    %s96 = sadd.s32 %s95, 1
    %p99 = scmp.eq.s32.totalorder %s14, 1
    %p100 = scmp.ne.s32.totalorder %s95, %s97
    %p101 = scmp.eq.s32.totalorder %s14, 0
    %p102 = por %p100, %p101
    %p103 = scmp.ne.s32.totalorder %s95, %s97
    %p104 = scmp.eq.s32.totalorder %s19, 1
    %p105 = por %p103, %p104
    %p106 = scmp.ne.s32.totalorder %s97, %s98
    %p107 = scmp.eq.s32.totalorder %s19, 0
    %p108 = por %p106, %p107
    %p109 = scmp.ne.s32.totalorder %s97, %s98
    %p110 = scmp.eq.s32.totalorder %s20, 1
    %p111 = por %p109, %p110
    %p113 = scmp.ne.s32.totalorder %s98, %s112
    %p114 = scmp.eq.s32.totalorder %s20, 0
    %p115 = por %p113, %p114
    %s117 = sadd.s32 %s116, 1
    %p120 = scmp.eq.s32.totalorder %s14, 1
    %p121 = scmp.ne.s32.totalorder %s116, %s118
    %p122 = scmp.eq.s32.totalorder %s14, 0
    %p123 = por %p121, %p122
    %p124 = scmp.ne.s32.totalorder %s116, %s118
    %p125 = scmp.eq.s32.totalorder %s19, 1
    %p126 = por %p124, %p125
    %p127 = scmp.ne.s32.totalorder %s118, %s119
    %p128 = scmp.eq.s32.totalorder %s19, 0
    %p129 = por %p127, %p128
    %p130 = scmp.ne.s32.totalorder %s118, %s119
    %p131 = scmp.eq.s32.totalorder %s20, 1
    %p132 = por %p130, %p131
    %p134 = scmp.ne.s32.totalorder %s119, %s133
    %p135 = scmp.eq.s32.totalorder %s20, 0
    %p136 = por %p134, %p135
    %s138 = sadd.s32 %s137, 1
    %p141 = scmp.eq.s32.totalorder %s14, 1
    %p142 = scmp.ne.s32.totalorder %s137, %s139
    %p143 = scmp.eq.s32.totalorder %s14, 0
    %p144 = por %p142, %p143
    %p145 = scmp.ne.s32.totalorder %s137, %s139
    %p146 = scmp.eq.s32.totalorder %s19, 1
    %p147 = por %p145, %p146
    %p148 = scmp.ne.s32.totalorder %s139, %s140
    %p149 = scmp.eq.s32.totalorder %s19, 0
    %p150 = por %p148, %p149
    %p151 = scmp.ne.s32.totalorder %s139, %s140
    %p152 = scmp.eq.s32.totalorder %s20, 1
    %p153 = por %p151, %p152
    %p155 = scmp.ne.s32.totalorder %s140, %s154
    %p156 = scmp.eq.s32.totalorder %s20, 0
    %p157 = por %p155, %p156
    %s158 = ssub.s32 %s14, %s21
    %p159 = scmp.eq.s32.totalorder %s158, 0
    %s161 = sadd.s32 %s160, 1
    %s162 = scalar_select %p159, %s160, %s161
    %p165 = pneg %p159
    %p166 = scmp.eq.s32.totalorder %s14, 1
    %p167 = por %p165, %p166
    %p168 = scmp.ne.s32.totalorder %s160, %s163
    %p169 = scmp.eq.s32.totalorder %s14, 0
    %p170 = por %p168, %p169
    %p171 = scmp.ne.s32.totalorder %s160, %s163
    %p172 = scmp.eq.s32.totalorder %s19, 1
    %p173 = por %p171, %p172
    %p174 = scmp.ne.s32.totalorder %s163, %s164
    %p175 = scmp.eq.s32.totalorder %s19, 0
    %p176 = por %p174, %p175
    %p177 = scmp.ne.s32.totalorder %s163, %s164
    %p178 = scmp.eq.s32.totalorder %s20, 1
    %p179 = por %p177, %p178
    %p181 = scmp.ne.s32.totalorder %s164, %s180
    %p182 = scmp.eq.s32.totalorder %s20, 0
    %p183 = por %p181, %p182
    %s184 = ssub.s32 %s14, %s21
    %p185 = scmp.eq.s32.totalorder %s184, 0
    %s187 = sadd.s32 %s186, 1
    %s188 = scalar_select %p185, %s186, %s187
    %p191 = pneg %p185
    %p192 = scmp.eq.s32.totalorder %s14, 1
    %p193 = por %p191, %p192
    %p194 = scmp.ne.s32.totalorder %s186, %s189
    %p195 = scmp.eq.s32.totalorder %s14, 0
    %p196 = por %p194, %p195
    %p197 = scmp.ne.s32.totalorder %s186, %s189
    %p198 = scmp.eq.s32.totalorder %s19, 1
    %p199 = por %p197, %p198
    %p200 = scmp.ne.s32.totalorder %s189, %s190
    %p201 = scmp.eq.s32.totalorder %s19, 0
    %p202 = por %p200, %p201
    %p203 = scmp.ne.s32.totalorder %s189, %s190
    %p204 = scmp.eq.s32.totalorder %s20, 1
    %p205 = por %p203, %p204
    %p207 = scmp.ne.s32.totalorder %s190, %s206
    %p208 = scmp.eq.s32.totalorder %s20, 0
    %p209 = por %p207, %p208
    %p210 = scmp.le.s32.totalorder 1, %s14
    %p211 = scmp.lt.s32.totalorder %s14, 3
    %p212 = pnand %p210, %p211
    %p213 = pneg %p212
    // Predicated region
    $region9: #{afa_layer_cam.1} parent=5 // pred_check
      _
    $region10: #{afa_layer_cam.1} parent=5 // pred_check_branch
      %215 = sbr.rel (%p212) target = $region12
    $region11: #{afa_layer_cam.1} parent=5 // pred_region
      %s216 = ssub.s32 %s14, 1
      // Predicated region
      $region13: #{afa_layer_cam.1} parent=11 // pred_check
        %p217 = pneg %p87
      $region14: #{afa_layer_cam.1} parent=11 // pred_check_branch
        %219 = sbr.rel (%p217) target = $region16
      $region15: #{afa_layer_cam.1} parent=11 // pred_region
        _
      $region16: #{afa_layer_cam.1} parent=11 // pred_fallthru
        _
      // Predicated region
      $region17: #{afa_layer_cam.1} parent=11 // pred_check
        %p220 = pneg %p108
      $region18: #{afa_layer_cam.1} parent=11 // pred_check_branch
        %222 = sbr.rel (%p220) target = $region20
      $region19: #{afa_layer_cam.1} parent=11 // pred_region
        _
      $region20: #{afa_layer_cam.1} parent=11 // pred_fallthru
        _
      // Predicated region
      $region21: #{afa_layer_cam.1} parent=11 // pred_check
        %p223 = pneg %p129
      $region22: #{afa_layer_cam.1} parent=11 // pred_check_branch
        %225 = sbr.rel (%p223) target = $region24
      $region23: #{afa_layer_cam.1} parent=11 // pred_region
        _
      $region24: #{afa_layer_cam.1} parent=11 // pred_fallthru
        _
      // Predicated region
      $region25: #{afa_layer_cam.1} parent=11 // pred_check
        %p226 = pneg %p150
      $region26: #{afa_layer_cam.1} parent=11 // pred_check_branch
        %228 = sbr.rel (%p226) target = $region28
      $region27: #{afa_layer_cam.1} parent=11 // pred_region
        _
      $region28: #{afa_layer_cam.1} parent=11 // pred_fallthru
        _
    $region12: #{afa_layer_cam.1} parent=5 // pred_fallthru
      _
    %p229 = scmp.lt.s32.totalorder %s14, 2
    // Predicated region
    $region29: #{afa_layer_cam.1} parent=5 // pred_check
      %p230 = pneg %p229
    $region30: #{afa_layer_cam.1} parent=5 // pred_check_branch
      %232 = sbr.rel (%p230) target = $region32
    $region31: #{afa_layer_cam.1} parent=5 // pred_region
      // Predicated region
      $region33: #{afa_layer_cam.1} parent=31 // pred_check
        %p233 = pneg %p34
      $region34: #{afa_layer_cam.1} parent=31 // pred_check_branch
        %235 = sbr.rel (%p233) target = $region36
      $region35: #{afa_layer_cam.1} parent=31 // pred_region
        %p236 = scmp.lt.s32.totalorder %s14, 1
        %s237 = scalar_select %p236, %s14, 1
        %s238 = smul.addr %s237, 4
        %s239 = smul.addr %s238, 8
        %s240 = scalar_lea.vmem %s0, %s239
      $region36: #{afa_layer_cam.1} parent=31 // pred_fallthru
        _
      // Predicated region
      $region37: #{afa_layer_cam.1} parent=31 // pred_check
        %p241 = pneg %p60
      $region38: #{afa_layer_cam.1} parent=31 // pred_check_branch
        %243 = sbr.rel (%p241) target = $region40
      $region39: #{afa_layer_cam.1} parent=31 // pred_region
        %p244 = scmp.lt.s32.totalorder %s14, 1
        %s245 = scalar_select %p244, %s14, 1
        %s246 = smul.addr %s245, 4
        %s247 = smul.addr %s246, 8
        %s248 = scalar_lea.vmem %s1, %s247
      $region40: #{afa_layer_cam.1} parent=31 // pred_fallthru
        _
    $region32: #{afa_layer_cam.1} parent=5 // pred_fallthru
      _
    %p249 = scmp.le.s32.totalorder 1, %s14
    %p250 = scmp.lt.s32.totalorder %s14, 3
    %p251 = pnand %p249, %p250
    %p252 = pneg %p251
    // Predicated region
    $region41: #{afa_layer_cam.1} parent=5 // pred_check
      _
    $region42: #{afa_layer_cam.1} parent=5 // pred_check_branch
      %254 = sbr.rel (%p251) target = $region44
    $region43: #{afa_layer_cam.1} parent=5 // pred_region
      %s255 = ssub.s32 %s14, 1
      %p256 = scmp.lt.s32.totalorder %s19, 1
      %s257 = scalar_select %p256, %s19, 1
      %s258 = smul.addr %s257, 4
      %s259 = smul.addr %s258, 8
      %s260 = scalar_lea.vmem %s0, %s259
      %p261 = pneg %p40
      %p262 = pneg %p37
      %p263 = scmp.lt.s32.totalorder %s19, 1
      %s264 = scalar_select %p263, %s19, 1
      %s265 = smul.addr %s264, 4
      %s266 = smul.addr %s265, 8
      %s267 = scalar_lea.vmem %s1, %s266
      %p268 = pneg %p66
      %p269 = pneg %p63
      %p270 = pneg %p87
      %p271 = pneg %p84
      %p272 = pneg %p108
      %p273 = pneg %p105
      %p274 = pneg %p129
      %p275 = pneg %p126
      %p276 = pneg %p150
      %p277 = pneg %p147
      %p278 = pneg %p176
      %p279 = pneg %p173
      %p280 = scmp.lt.s32.totalorder %s19, 1
      %s281 = scalar_select %p280, %s19, 1
      %s282 = smul.addr %s281, 4
      %s283 = smul.addr %s282, 8
      %s284 = scalar_lea.vmem %s6, %s283
      %p285 = pneg %p202
      %p286 = pneg %p199
      %p287 = scmp.lt.s32.totalorder %s19, 1
      %s288 = scalar_select %p287, %s19, 1
      %s289 = smul.addr %s288, 4
      %s290 = smul.addr %s289, 8
      %s291 = scalar_lea.vmem %s7, %s290
      %p292 = scmp.lt.s32.totalorder %s19, 1
      %s293 = scalar_select %p292, %s19, 1
      %s294 = smul.addr %s293, 4
      %s295 = smul.addr %s294, 8
      %s296 = scalar_lea.vmem %s0, %s295
      %p297 = scmp.lt.s32.totalorder %s19, 1
      %s298 = scalar_select %p297, %s19, 1
      %s299 = smul.addr %s298, 4
      %s300 = smul.addr %s299, 8
      %s301 = scalar_lea.vmem %s1, %s300
      %p302 = scmp.lt.s32.totalorder %s19, 1
      %s303 = scalar_select %p302, %s19, 1
      %s304 = smul.addr %s303, 4
      %s305 = smul.addr %s304, 8
      %s306 = scalar_lea.vmem %s6, %s305
      %p307 = scmp.lt.s32.totalorder %s19, 1
      %s308 = scalar_select %p307, %s19, 1
      %s309 = smul.addr %s308, 4
      %s310 = smul.addr %s309, 8
      %s311 = scalar_lea.vmem %s7, %s310
      %v312 = vld [vmem:[%s296] sm:$0xff]
      %v313 = vld [vmem:[%s296 + $0x8] sm:$0xff]
      %v314 = vld [vmem:[%s296 + $0x10] sm:$0xff]
      %v315 = vld [vmem:[%s296 + $0x18] sm:$0xff]
      %v316 = vld [vmem:[%s301] sm:$0xff]
      %v317 = vld [vmem:[%s301 + $0x8] sm:$0xff]
      %v318 = vld [vmem:[%s301 + $0x10] sm:$0xff]
      %v319 = vld [vmem:[%s301 + $0x18] sm:$0xff]
      %v320 = vadd.f32 %v312, %v313
      %321 = vadd.xlane.f32.xlu0 %v320
      %v322 = vpop.xlane.xlu0 %321
      %v323 = vadd.f32 %v314, %v315
      %324 = vadd.xlane.f32.xlu0 %v323
      %v325 = vpop.xlane.xlu0 %324
      %v326 = vmul.f32 %v322, 0.00390625
      %v327 = vmul.f32 %v325, 0.00390625
      %v328 = vadd.f32 %v316, %v317
      %329 = vadd.xlane.f32.xlu0 %v328
      %v330 = vpop.xlane.xlu0 %329
      %v331 = vadd.f32 %v318, %v319
      %332 = vadd.xlane.f32.xlu0 %v331
      %v333 = vpop.xlane.xlu0 %332
      %v334 = vmul.f32 %v330, 0.00390625
      %v335 = vmul.f32 %v333, 0.00390625
      %v336 = vld [vmem:[%s2] sm:$0xff]
      %v337 = vld [vmem:[%s2 + $0x8] sm:$0xff]
      %v338 = vld [vmem:[%s2 + $0x10] sm:$0xff]
      %v339 = vld [vmem:[%s2 + $0x18] sm:$0xff]
      %v340 = vld [vmem:[%s3] sm:$0xff]
      %v341 = vld [vmem:[%s3 + $0x8] sm:$0xff]
      %v342 = vld [vmem:[%s3 + $0x10] sm:$0xff]
      %v343 = vld [vmem:[%s3 + $0x18] sm:$0xff]
      %vm344 = vcmask 130048
      %v346 = vsel %vm344, %v340, 0
      %v349 = vsel %vm344, %v341, 0
      %v352 = vsel %vm344, %v342, 0
      %v355 = vsel %vm344, %v343, 0
      %357 = vmatprep.subr.mxu0 0.0
      %358 = vmatpush1.msra.mxu0 0.0
      %359 = vmatprep.subr.mxu0 0.0
      %360 = vmatpush1.msra.mxu0 0.0
      %361 = vmatprep.subr.mxu0 0.0
      %362 = vmatpush1.msra.mxu0 0.0
      %363 = vmatprep.subr.mxu0 0.0
      %364 = vmatpush1.msra.mxu0 0.0
      %365 = vmatprep.subr.mxu0 0.0
      %366 = vmatpush1.msra.mxu0 0.0
      %367 = vmatprep.subr.mxu0 0.0
      %368 = vmatpush1.msra.mxu0 0.0
      %369 = vmatprep.subr.mxu0 0.0
      %370 = vmatpush1.msra.mxu0 0.0
      %371 = vmatprep.subr.mxu0 0.0
      %372 = vmatpush1.msra.mxu0 0.0
      %373 = vmatprep.subr.mxu0 0.0
      %374 = vmatpush1.msra.mxu0 0.0
      %375 = vmatprep.subr.mxu0 0.0
      %376 = vmatpush1.msra.mxu0 0.0
      %377 = vmatprep.subr.mxu0 0.0
      %378 = vmatpush1.msra.mxu0 0.0
      %379 = vmatprep.subr.mxu0 0.0
      %380 = vmatpush1.msra.mxu0 0.0
      %381 = vmatprep.subr.mxu0 0.0
      %382 = vmatpush1.msra.mxu0 0.0
      %383 = vmatprep.subr.mxu0 0.0
      %384 = vmatpush1.msra.mxu0 0.0
      %385 = vmatprep.subr.mxu0 0.0
      %386 = vmatpush1.msra.mxu0 %v335
      %387 = vmatprep.subr.mxu0 0.0
      %388 = vmatpush1.msra.mxu0 %v334
      %389 = vmatprep.subr.mxu0 0.0
      %390 = vmatpush2.msra.mxu0 0.0
      %391 = vmatprep.subr.mxu0 0.0
      %392 = vmatpush2.msra.mxu0 0.0
      %393 = vmatprep.subr.mxu0 0.0
      %394 = vmatpush2.msra.mxu0 0.0
      %395 = vmatprep.subr.mxu0 0.0
      %396 = vmatpush2.msra.mxu0 0.0
      %397 = vmatprep.subr.mxu0 0.0
      %398 = vmatpush2.msra.mxu0 0.0
      %399 = vmatprep.subr.mxu0 0.0
      %400 = vmatpush2.msra.mxu0 0.0
      %401 = vmatprep.subr.mxu0 0.0
      %402 = vmatpush2.msra.mxu0 0.0
      %403 = vmatprep.subr.mxu0 0.0
      %404 = vmatpush2.msra.mxu0 0.0
      %405 = vmatprep.subr.mxu0 0.0
      %406 = vmatpush2.msra.mxu0 0.0
      %407 = vmatprep.subr.mxu0 0.0
      %408 = vmatpush2.msra.mxu0 0.0
      %409 = vmatprep.subr.mxu0 0.0
      %410 = vmatpush2.msra.mxu0 0.0
      %411 = vmatprep.subr.mxu0 0.0
      %412 = vmatpush2.msra.mxu0 0.0
      %413 = vmatprep.subr.mxu0 0.0
      %414 = vmatpush2.msra.mxu0 0.0
      %415 = vmatprep.subr.mxu0 0.0
      %416 = vmatpush2.msra.mxu0 0.0
      %417 = vmatprep.subr.mxu0 0.0
      %418 = vmatpush2.msra.mxu0 0.0
      %419 = vmatprep.subr.mxu0 0.0
      %420 = vmatpush2.msra.mxu0 0.0
      %421 = vmatprep.mubr.f32.mxu0 0.0
      %422 = vmatmul.mubr.f32.gmra.mxu0 %v346
      %v423 = vpop.f32.mrf.mxu0
      %v424 = vadd.f32 0.0, %v423
      %v425 = vpop.f32.mrf.mxu0
      %426 = vmatprep.mubr.f32.mxu0 0.0
      %427 = vmatmul.mubr.f32.gmra.mxu0 %v349
      %v428 = vpop.f32.mrf.mxu0
      %v429 = vadd.f32 0.0, %v428
      %v430 = vpop.f32.mrf.mxu0
      %431 = vmatprep.mubr.f32.mxu0 0.0
      %432 = vmatmul.mubr.f32.gmra.mxu0 %v352
      %v433 = vpop.f32.mrf.mxu0
      %v434 = vadd.f32 0.0, %v433
      %v435 = vpop.f32.mrf.mxu0
      %436 = vmatprep.mubr.f32.mxu0 0.0
      %437 = vmatmul.mubr.f32.gmra.mxu0 %v355
      %v438 = vpop.f32.mrf.mxu0
      %v439 = vadd.f32 0.0, %v438
      %v440 = vpop.f32.mrf.mxu0
      %441 = vdwg.mxu0
      %v443 = vsel %vm344, %v336, 0
      %v446 = vsel %vm344, %v337, 0
      %v449 = vsel %vm344, %v338, 0
      %v452 = vsel %vm344, %v339, 0
      %454 = vmatprep.subr.mxu0 0.0
      %455 = vmatpush1.msra.mxu0 0.0
      %456 = vmatprep.subr.mxu0 0.0
      %457 = vmatpush1.msra.mxu0 0.0
      %458 = vmatprep.subr.mxu0 0.0
      %459 = vmatpush1.msra.mxu0 0.0
      %460 = vmatprep.subr.mxu0 0.0
      %461 = vmatpush1.msra.mxu0 0.0
      %462 = vmatprep.subr.mxu0 0.0
      %463 = vmatpush1.msra.mxu0 0.0
      %464 = vmatprep.subr.mxu0 0.0
      %465 = vmatpush1.msra.mxu0 0.0
      %466 = vmatprep.subr.mxu0 0.0
      %467 = vmatpush1.msra.mxu0 0.0
      %468 = vmatprep.subr.mxu0 0.0
      %469 = vmatpush1.msra.mxu0 0.0
      %470 = vmatprep.subr.mxu0 0.0
      %471 = vmatpush1.msra.mxu0 0.0
      %472 = vmatprep.subr.mxu0 0.0
      %473 = vmatpush1.msra.mxu0 0.0
      %474 = vmatprep.subr.mxu0 0.0
      %475 = vmatpush1.msra.mxu0 0.0
      %476 = vmatprep.subr.mxu0 0.0
      %477 = vmatpush1.msra.mxu0 0.0
      %478 = vmatprep.subr.mxu0 0.0
      %479 = vmatpush1.msra.mxu0 0.0
      %480 = vmatprep.subr.mxu0 0.0
      %481 = vmatpush1.msra.mxu0 0.0
      %482 = vmatprep.subr.mxu0 0.0
      %483 = vmatpush1.msra.mxu0 %v327
      %484 = vmatprep.subr.mxu0 0.0
      %485 = vmatpush1.msra.mxu0 %v326
      %486 = vmatprep.subr.mxu0 0.0
      %487 = vmatpush2.msra.mxu0 0.0
      %488 = vmatprep.subr.mxu0 0.0
      %489 = vmatpush2.msra.mxu0 0.0
      %490 = vmatprep.subr.mxu0 0.0
      %491 = vmatpush2.msra.mxu0 0.0
      %492 = vmatprep.subr.mxu0 0.0
      %493 = vmatpush2.msra.mxu0 0.0
      %494 = vmatprep.subr.mxu0 0.0
      %495 = vmatpush2.msra.mxu0 0.0
      %496 = vmatprep.subr.mxu0 0.0
      %497 = vmatpush2.msra.mxu0 0.0
      %498 = vmatprep.subr.mxu0 0.0
      %499 = vmatpush2.msra.mxu0 0.0
      %500 = vmatprep.subr.mxu0 0.0
      %501 = vmatpush2.msra.mxu0 0.0
      %502 = vmatprep.subr.mxu0 0.0
      %503 = vmatpush2.msra.mxu0 0.0
      %504 = vmatprep.subr.mxu0 0.0
      %505 = vmatpush2.msra.mxu0 0.0
      %506 = vmatprep.subr.mxu0 0.0
      %507 = vmatpush2.msra.mxu0 0.0
      %508 = vmatprep.subr.mxu0 0.0
      %509 = vmatpush2.msra.mxu0 0.0
      %510 = vmatprep.subr.mxu0 0.0
      %511 = vmatpush2.msra.mxu0 0.0
      %512 = vmatprep.subr.mxu0 0.0
      %513 = vmatpush2.msra.mxu0 0.0
      %514 = vmatprep.subr.mxu0 0.0
      %515 = vmatpush2.msra.mxu0 0.0
      %516 = vmatprep.subr.mxu0 0.0
      %517 = vmatpush2.msra.mxu0 0.0
      %518 = vmatprep.mubr.f32.mxu0 0.0
      %519 = vmatmul.mubr.f32.gmra.mxu0 %v443
      %v520 = vpop.f32.mrf.mxu0
      %v521 = vadd.f32 %v424, %v520
      %v522 = vpop.f32.mrf.mxu0
      %523 = vmatprep.mubr.f32.mxu0 0.0
      %524 = vmatmul.mubr.f32.gmra.mxu0 %v446
      %v525 = vpop.f32.mrf.mxu0
      %v526 = vadd.f32 %v429, %v525
      %v527 = vpop.f32.mrf.mxu0
      %528 = vmatprep.mubr.f32.mxu0 0.0
      %529 = vmatmul.mubr.f32.gmra.mxu0 %v449
      %v530 = vpop.f32.mrf.mxu0
      %v531 = vadd.f32 %v434, %v530
      %v532 = vpop.f32.mrf.mxu0
      %533 = vmatprep.mubr.f32.mxu0 0.0
      %534 = vmatmul.mubr.f32.gmra.mxu0 %v452
      %v535 = vpop.f32.mrf.mxu0
      %v536 = vadd.f32 %v439, %v535
      %v537 = vpop.f32.mrf.mxu0
      %538 = vdwg.mxu0
      %v539 = vmax.f32 %v521, 0.0
      %v540 = vmax.f32 %v526, 0.0
      %v541 = vmax.f32 %v531, 0.0
      %v542 = vmax.f32 %v536, 0.0
      %v543 = vld [vmem:[%s4] sm:$0xff]
      %v544 = vld [vmem:[%s4 + $0x8] sm:$0xff]
      %vm545 = vcmask 261120
      %v547 = vsel %vm545, %v543, 0
      %v550 = vsel %vm545, %v544, 0
      %552 = vmatprep.subr.mxu0 0.0
      %553 = vmatpush1.msra.mxu0 0.0
      %554 = vmatprep.subr.mxu0 0.0
      %555 = vmatpush1.msra.mxu0 0.0
      %556 = vmatprep.subr.mxu0 0.0
      %557 = vmatpush1.msra.mxu0 0.0
      %558 = vmatprep.subr.mxu0 0.0
      %559 = vmatpush1.msra.mxu0 0.0
      %560 = vmatprep.subr.mxu0 0.0
      %561 = vmatpush1.msra.mxu0 0.0
      %562 = vmatprep.subr.mxu0 0.0
      %563 = vmatpush1.msra.mxu0 0.0
      %564 = vmatprep.subr.mxu0 0.0
      %565 = vmatpush1.msra.mxu0 0.0
      %566 = vmatprep.subr.mxu0 0.0
      %567 = vmatpush1.msra.mxu0 0.0
      %568 = vmatprep.subr.mxu0 0.0
      %569 = vmatpush1.msra.mxu0 0.0
      %570 = vmatprep.subr.mxu0 0.0
      %571 = vmatpush1.msra.mxu0 0.0
      %572 = vmatprep.subr.mxu0 0.0
      %573 = vmatpush1.msra.mxu0 0.0
      %574 = vmatprep.subr.mxu0 0.0
      %575 = vmatpush1.msra.mxu0 0.0
      %576 = vmatprep.subr.mxu0 0.0
      %577 = vmatpush1.msra.mxu0 %v542
      %578 = vmatprep.subr.mxu0 0.0
      %579 = vmatpush1.msra.mxu0 %v541
      %580 = vmatprep.subr.mxu0 0.0
      %581 = vmatpush1.msra.mxu0 %v540
      %582 = vmatprep.subr.mxu0 0.0
      %583 = vmatpush1.msra.mxu0 %v539
      %584 = vmatprep.subr.mxu0 0.0
      %585 = vmatpush2.msra.mxu0 0.0
      %586 = vmatprep.subr.mxu0 0.0
      %587 = vmatpush2.msra.mxu0 0.0
      %588 = vmatprep.subr.mxu0 0.0
      %589 = vmatpush2.msra.mxu0 0.0
      %590 = vmatprep.subr.mxu0 0.0
      %591 = vmatpush2.msra.mxu0 0.0
      %592 = vmatprep.subr.mxu0 0.0
      %593 = vmatpush2.msra.mxu0 0.0
      %594 = vmatprep.subr.mxu0 0.0
      %595 = vmatpush2.msra.mxu0 0.0
      %596 = vmatprep.subr.mxu0 0.0
      %597 = vmatpush2.msra.mxu0 0.0
      %598 = vmatprep.subr.mxu0 0.0
      %599 = vmatpush2.msra.mxu0 0.0
      %600 = vmatprep.subr.mxu0 0.0
      %601 = vmatpush2.msra.mxu0 0.0
      %602 = vmatprep.subr.mxu0 0.0
      %603 = vmatpush2.msra.mxu0 0.0
      %604 = vmatprep.subr.mxu0 0.0
      %605 = vmatpush2.msra.mxu0 0.0
      %606 = vmatprep.subr.mxu0 0.0
      %607 = vmatpush2.msra.mxu0 0.0
      %608 = vmatprep.subr.mxu0 0.0
      %609 = vmatpush2.msra.mxu0 0.0
      %610 = vmatprep.subr.mxu0 0.0
      %611 = vmatpush2.msra.mxu0 0.0
      %612 = vmatprep.subr.mxu0 0.0
      %613 = vmatpush2.msra.mxu0 0.0
      %614 = vmatprep.subr.mxu0 0.0
      %615 = vmatpush2.msra.mxu0 0.0
      %616 = vmatprep.mubr.f32.mxu0 0.0
      %617 = vmatmul.mubr.f32.gmra.mxu0 %v547
      %v618 = vpop.f32.mrf.mxu0
      %v619 = vadd.f32 0.0, %v618
      %v620 = vpop.f32.mrf.mxu0
      %621 = vmatprep.mubr.f32.mxu0 0.0
      %622 = vmatmul.mubr.f32.gmra.mxu0 %v550
      %v623 = vpop.f32.mrf.mxu0
      %v624 = vadd.f32 0.0, %v623
      %v625 = vpop.f32.mrf.mxu0
      %626 = vdwg.mxu0
      %v627 = vld [vmem:[%s5] sm:$0xff]
      %v628 = vld [vmem:[%s5 + $0x8] sm:$0xff]
      %v630 = vsel %vm545, %v627, 0
      %v633 = vsel %vm545, %v628, 0
      %635 = vmatprep.subr.mxu0 0.0
      %636 = vmatpush1.msra.mxu0 0.0
      %637 = vmatprep.subr.mxu0 0.0
      %638 = vmatpush1.msra.mxu0 0.0
      %639 = vmatprep.subr.mxu0 0.0
      %640 = vmatpush1.msra.mxu0 0.0
      %641 = vmatprep.subr.mxu0 0.0
      %642 = vmatpush1.msra.mxu0 0.0
      %643 = vmatprep.subr.mxu0 0.0
      %644 = vmatpush1.msra.mxu0 0.0
      %645 = vmatprep.subr.mxu0 0.0
      %646 = vmatpush1.msra.mxu0 0.0
      %647 = vmatprep.subr.mxu0 0.0
      %648 = vmatpush1.msra.mxu0 0.0
      %649 = vmatprep.subr.mxu0 0.0
      %650 = vmatpush1.msra.mxu0 0.0
      %651 = vmatprep.subr.mxu0 0.0
      %652 = vmatpush1.msra.mxu0 0.0
      %653 = vmatprep.subr.mxu0 0.0
      %654 = vmatpush1.msra.mxu0 0.0
      %655 = vmatprep.subr.mxu0 0.0
      %656 = vmatpush1.msra.mxu0 0.0
      %657 = vmatprep.subr.mxu0 0.0
      %658 = vmatpush1.msra.mxu0 0.0
      %659 = vmatprep.subr.mxu0 0.0
      %660 = vmatpush1.msra.mxu0 %v542
      %661 = vmatprep.subr.mxu0 0.0
      %662 = vmatpush1.msra.mxu0 %v541
      %663 = vmatprep.subr.mxu0 0.0
      %664 = vmatpush1.msra.mxu0 %v540
      %665 = vmatprep.subr.mxu0 0.0
      %666 = vmatpush1.msra.mxu0 %v539
      %667 = vmatprep.subr.mxu0 0.0
      %668 = vmatpush2.msra.mxu0 0.0
      %669 = vmatprep.subr.mxu0 0.0
      %670 = vmatpush2.msra.mxu0 0.0
      %671 = vmatprep.subr.mxu0 0.0
      %672 = vmatpush2.msra.mxu0 0.0
      %673 = vmatprep.subr.mxu0 0.0
      %674 = vmatpush2.msra.mxu0 0.0
      %675 = vmatprep.subr.mxu0 0.0
      %676 = vmatpush2.msra.mxu0 0.0
      %677 = vmatprep.subr.mxu0 0.0
      %678 = vmatpush2.msra.mxu0 0.0
      %679 = vmatprep.subr.mxu0 0.0
      %680 = vmatpush2.msra.mxu0 0.0
      %681 = vmatprep.subr.mxu0 0.0
      %682 = vmatpush2.msra.mxu0 0.0
      %683 = vmatprep.subr.mxu0 0.0
      %684 = vmatpush2.msra.mxu0 0.0
      %685 = vmatprep.subr.mxu0 0.0
      %686 = vmatpush2.msra.mxu0 0.0
      %687 = vmatprep.subr.mxu0 0.0
      %688 = vmatpush2.msra.mxu0 0.0
      %689 = vmatprep.subr.mxu0 0.0
      %690 = vmatpush2.msra.mxu0 0.0
      %691 = vmatprep.subr.mxu0 0.0
      %692 = vmatpush2.msra.mxu0 0.0
      %693 = vmatprep.subr.mxu0 0.0
      %694 = vmatpush2.msra.mxu0 0.0
      %695 = vmatprep.subr.mxu0 0.0
      %696 = vmatpush2.msra.mxu0 0.0
      %697 = vmatprep.subr.mxu0 0.0
      %698 = vmatpush2.msra.mxu0 0.0
      %699 = vmatprep.mubr.f32.mxu0 0.0
      %700 = vmatmul.mubr.f32.gmra.mxu0 %v630
      %v701 = vpop.f32.mrf.mxu0
      %v702 = vadd.f32 0.0, %v701
      %v703 = vpop.f32.mrf.mxu0
      %704 = vmatprep.mubr.f32.mxu0 0.0
      %705 = vmatmul.mubr.f32.gmra.mxu0 %v633
      %v706 = vpop.f32.mrf.mxu0
      %v707 = vadd.f32 0.0, %v706
      %v708 = vpop.f32.mrf.mxu0
      %709 = vdwg.mxu0
      %v710 = vmax.f32 %v619, %v702
      %v711 = vmax.f32 %v624, %v707
      %v712 = vsub.f32 %v619, %v710
      %v713 = vsub.f32 %v624, %v711
      %v714 = vmul.f32 %v712, 1.442695
      %v715 = vpow.pop %v714
      %v716 = vmul.f32 %v713, 1.442695
      %v717 = vpow.pop %v716
      %v718 = vsub.f32 %v702, %v710
      %v719 = vsub.f32 %v707, %v711
      %v720 = vmul.f32 %v718, 1.442695
      %v721 = vpow.pop %v720
      %v722 = vmul.f32 %v719, 1.442695
      %v723 = vpow.pop %v722
      %v724 = vadd.f32 %v715, %v721
      %v725 = vadd.f32 %v717, %v723
      %v726 = vrcp.pop %v724
      %v727 = vrcp.pop %v725
      %v728 = vmul.f32 %v715, %v726
      %v729 = vmul.f32 %v717, %v727
      %v730 = vmul.f32 %v721, %v726
      %v731 = vmul.f32 %v723, %v727
      %733 = vset.pattern.permute.xlu0 0
      %734 = vperm.xlu0 %733, %v728
      %v735 = vpop.permute.xlu0 %734
      %738 = vset.pattern.permute.xlu0 0
      %739 = vperm.xlu0 %738, %v729
      %v740 = vpop.permute.xlu0 %739
      %v742 = vmul.f32 %v735, %v312
      %v743 = vmul.f32 %v735, %v313
      %v744 = vmul.f32 %v740, %v314
      %v745 = vmul.f32 %v740, %v315
      %747 = vset.pattern.permute.xlu0 0
      %748 = vperm.xlu0 %747, %v730
      %v749 = vpop.permute.xlu0 %748
      %752 = vset.pattern.permute.xlu0 0
      %753 = vperm.xlu0 %752, %v731
      %v754 = vpop.permute.xlu0 %753
      %v756 = vmul.f32 %v749, %v316
      %v757 = vmul.f32 %v749, %v317
      %v758 = vmul.f32 %v754, %v318
      %v759 = vmul.f32 %v754, %v319
      %v760 = vadd.f32 %v742, %v756
      %v761 = vadd.f32 %v743, %v757
      %v762 = vadd.f32 %v744, %v758
      %v763 = vadd.f32 %v745, %v759
      %v764 = vmax.f32 %v760, 0.0
      %v765 = vmax.f32 %v761, 0.0
      %v766 = vmax.f32 %v762, 0.0
      %v767 = vmax.f32 %v763, 0.0
      %768 = vst [vmem:[%s306] sm:$0xff] %v764
      %769 = vst [vmem:[%s306 + $0x8] sm:$0xff] %v765
      %770 = vst [vmem:[%s306 + $0x10] sm:$0xff] %v766
      %771 = vst [vmem:[%s306 + $0x18] sm:$0xff] %v767
      %v772 = vmul.f32 %v735, %v316
      %v773 = vmul.f32 %v735, %v317
      %v774 = vmul.f32 %v740, %v318
      %v775 = vmul.f32 %v740, %v319
      %v776 = vmul.f32 %v749, %v312
      %v777 = vmul.f32 %v749, %v313
      %v778 = vmul.f32 %v754, %v314
      %v779 = vmul.f32 %v754, %v315
      %v780 = vadd.f32 %v772, %v776
      %v781 = vadd.f32 %v773, %v777
      %v782 = vadd.f32 %v774, %v778
      %v783 = vadd.f32 %v775, %v779
      %v784 = vmax.f32 %v780, 0.0
      %v785 = vmax.f32 %v781, 0.0
      %v786 = vmax.f32 %v782, 0.0
      %v787 = vmax.f32 %v783, 0.0
      %788 = vst [vmem:[%s311] sm:$0xff] %v784
      %789 = vst [vmem:[%s311 + $0x8] sm:$0xff] %v785
      %790 = vst [vmem:[%s311 + $0x10] sm:$0xff] %v786
      %791 = vst [vmem:[%s311 + $0x18] sm:$0xff] %v787
      %p792 = scmp.lt.s32.totalorder %s19, 1
      %s793 = scalar_select %p792, %s19, 1
      %s794 = smul.addr %s793, 4
      %s795 = smul.addr %s794, 8
      %s796 = scalar_lea.vmem %s6, %s795
      %p797 = scmp.lt.s32.totalorder %s19, 1
      %s798 = scalar_select %p797, %s19, 1
      %s799 = smul.addr %s798, 4
      %s800 = smul.addr %s799, 8
      %s801 = scalar_lea.vmem %s7, %s800
      // Predicated region
      $region45: #{afa_layer_cam.1} parent=43 // pred_check
        %p802 = pneg %p173
      $region46: #{afa_layer_cam.1} parent=43 // pred_check_branch
        %804 = sbr.rel (%p802) target = $region48
      $region47: #{afa_layer_cam.1} parent=43 // pred_region
        _
      $region48: #{afa_layer_cam.1} parent=43 // pred_fallthru
        _
      // Predicated region
      $region49: #{afa_layer_cam.1} parent=43 // pred_check
        %p805 = pneg %p199
      $region50: #{afa_layer_cam.1} parent=43 // pred_check_branch
        %807 = sbr.rel (%p805) target = $region52
      $region51: #{afa_layer_cam.1} parent=43 // pred_region
        _
      $region52: #{afa_layer_cam.1} parent=43 // pred_fallthru
        _
    $region44: #{afa_layer_cam.1} parent=5 // pred_fallthru
      _
    %p808 = scmp.le.s32.totalorder 2, %s14
    // Predicated region
    $region53: #{afa_layer_cam.1} parent=5 // pred_check
      %p809 = pneg %p808
    $region54: #{afa_layer_cam.1} parent=5 // pred_check_branch
      %811 = sbr.rel (%p809) target = $region56
    $region55: #{afa_layer_cam.1} parent=5 // pred_region
      %s812 = ssub.s32 %s14, 2
      // Predicated region
      $region57: #{afa_layer_cam.1} parent=55 // pred_check
        %p813 = pneg %p179
      $region58: #{afa_layer_cam.1} parent=55 // pred_check_branch
        %815 = sbr.rel (%p813) target = $region60
      $region59: #{afa_layer_cam.1} parent=55 // pred_region
        %p816 = scmp.lt.s32.totalorder %s20, 1
        %s817 = scalar_select %p816, %s20, 1
        %s818 = smul.addr %s817, 4
        %s819 = smul.addr %s818, 8
        %s820 = scalar_lea.vmem %s6, %s819
      $region60: #{afa_layer_cam.1} parent=55 // pred_fallthru
        _
      // Predicated region
      $region61: #{afa_layer_cam.1} parent=55 // pred_check
        %p821 = pneg %p205
      $region62: #{afa_layer_cam.1} parent=55 // pred_check_branch
        %823 = sbr.rel (%p821) target = $region64
      $region63: #{afa_layer_cam.1} parent=55 // pred_region
        %p824 = scmp.lt.s32.totalorder %s20, 1
        %s825 = scalar_select %p824, %s20, 1
        %s826 = smul.addr %s825, 4
        %s827 = smul.addr %s826, 8
        %s828 = scalar_lea.vmem %s7, %s827
      $region64: #{afa_layer_cam.1} parent=55 // pred_fallthru
        _
    $region56: #{afa_layer_cam.1} parent=5 // pred_fallthru
      _
  $region6: #{afa_layer_cam.1} parent=0 // loop_footer
    %s18 = sadd.s32 1, %s14
  $region7: #{afa_layer_cam.1} parent=0 // loop_footer_branch
    %13 = sbr.rel target = $region3
  $region8: #{afa_layer_cam.1} parent=0 // loop_exit
    _

</llo_original>
